<compile_context>
chip_gen: v5e
topology: v5e:2x2
jax: 0.10.0
libtpu: 0.0.40
codegen_flags: <defaults>
</compile_context>

<pallas_src>
from typing import Callable, Mapping

import jax
import jax.numpy as jnp
from jax.experimental import pallas as pl
from jax.experimental.pallas import tpu as pltpu


LANE = 128          # vreg lane width (last dim)
BF16_SUBLANE = 16   # bf16 sublane pack height (second-to-last dim)


def _round_up(n: int, m: int) -> int:
    return ((n + m - 1) // m) * m


# ----------------------------------------------------------------------------
# Pallas kernel: fused 2-layer MLP  y = relu(x @ W1 + b1) @ W2 + b2
# One batch tile per grid step; weights / biases are VMEM-resident
# (constant index_maps -> fetched once, never re-DMA'd).
# ----------------------------------------------------------------------------
def _mlp_kernel(x_ref, w1_ref, b1_ref, w2_ref, b2_ref, o_ref):
    # x arrives pre-cast to the weight dtype (bf16) by the wrapper.
    h = jnp.dot(x_ref[...], w1_ref[...], preferred_element_type=jnp.float32)
    h = jnp.maximum(h + b1_ref[...], 0.0)                        # f32 epilogue (VPU)
    y = jnp.dot(h.astype(w2_ref.dtype), w2_ref[...],
                preferred_element_type=jnp.float32)
    o_ref[...] = (y + b2_ref[...]).astype(o_ref.dtype)


def _vmem_limit_bytes(tb, d_in, h_p, d_out_p, x_itemsize, out_itemsize,
                      resident_bytes):
    """Derive an explicit VMEM budget from the actual tile/weight sizes,
    capped against the per-TensorCore physical VMEM of the current chip."""
    streamed = 2 * tb * d_in * x_itemsize + 2 * tb * d_out_p * out_itemsize
    intermediate = tb * h_p * 4                    # f32 hidden activations
    # Residents are double-buffered by the default pipeline (2x).
    # TODO(synk): single-buffer them via pipeline_mode=pl.Buffered(1) once that
    # path is exercised; at these weight sizes the saving is negligible.
    needed = streamed + 2 * resident_bytes + intermediate
    try:
        phys = pltpu.get_tpu_info().vmem_capacity_bytes   # 64 MiB v7x, 128 MiB v5e/v6e
    except Exception:
        phys = 64 << 20                                   # conservative fallback
    cap = (phys * 3) // 4
    return int(max(8 << 20, min((needed * 3) // 2 + (2 << 20), cap)))


def fused_mlp(x, w1, b1, w2, b2, *, block_b: int = 512, out_dtype=None):
    """Fused MLP.  x: (B, D_in) — D_in may be unpadded (block == full dim);
    W1: (D_in, H_p), W2: (H_p, D_out_p) with H_p, D_out_p multiples of 128."""
    x = x.astype(w1.dtype)                   # no-op if wrapper already cast to bf16
    B, D_in = x.shape
    D_in_w, H_p = w1.shape
    H_w, D_out_p = w2.shape
    assert D_in == D_in_w and H_p == H_w
    assert H_p % LANE == 0 and D_out_p % LANE == 0, (
        "hidden / output feature dims must be padded to multiples of 128")
    if out_dtype is None:
        out_dtype = x.dtype                  # bf16 output -> halved writeback

    # Batch tile: multiple of the bf16 sublane pack (16), capped at block_b.
    TB = min(_round_up(block_b, BF16_SUBLANE), _round_up(B, BF16_SUBLANE))
    grid = (pl.cdiv(B, TB),)                 # partial last tile handled by Pallas

    resident_bytes = (w1.size * w1.dtype.itemsize + b1.size * b1.dtype.itemsize
                      + w2.size * w2.dtype.itemsize + b2.size * b2.dtype.itemsize)
    out_itemsize = jnp.dtype(out_dtype).itemsize
    vmem_limit = _vmem_limit_bytes(TB, D_in, H_p, D_out_p,
                                   x.dtype.itemsize, out_itemsize, resident_bytes)

    cost = pl.CostEstimate(
        flops=2 * B * (D_in * H_p + H_p * D_out_p),
        transcendentals=0,
        bytes_accessed=(B * D_in * x.dtype.itemsize
                        + resident_bytes
                        + B * D_out_p * out_itemsize),
    )

    out = pl.pallas_call(
        _mlp_kernel,
        out_shape=jax.ShapeDtypeStruct((B, D_out_p), out_dtype),
        grid_spec=pl.GridSpec(
            grid=grid,
            in_specs=[
                pl.BlockSpec((TB, D_in), lambda i: (i, 0)),      # x: streamed
                pl.BlockSpec((D_in, H_p), lambda i: (0, 0)),     # W1: resident
                pl.BlockSpec((1, H_p), lambda i: (0, 0)),        # b1: resident
                pl.BlockSpec((H_p, D_out_p), lambda i: (0, 0)),  # W2: resident
                pl.BlockSpec((1, D_out_p), lambda i: (0, 0)),    # b2: resident
            ],
            out_specs=pl.BlockSpec((TB, D_out_p), lambda i: (i, 0)),
        ),
        compiler_params=pltpu.CompilerParams(
            dimension_semantics=("parallel",),   # batch tiles are independent
            vmem_limit_bytes=vmem_limit,         # derived, v7x-safe budget
        ),
        cost_estimate=cost,
    )(x, w1, b1, w2, b2)
    return out
    # TODO(synk): if D_in / H ever grow past a few K (per-layer weights > ~10 MiB),
    # add trailing K/N grid axes with an f32 VMEM accumulator (pl.when init/finalize)
    # instead of whole-weight resident blocks.


# ----------------------------------------------------------------------------
# JAX mirror of the PyTorch `Wrapper` module (pure dispatch glue)
# ----------------------------------------------------------------------------
class Wrapper:
    """JAX equivalent of the PyTorch Wrapper: forward(*args, **kwargs) = f(...)."""

    def __init__(self, f: Callable, modules: Mapping[str, Callable]):
        self.f = f
        self.modules = modules

    def __call__(self, *args, **kwargs):
        return self.f(*args, **kwargs)


# ----------------------------------------------------------------------------
# Deterministic parameter init (pre-transposed, selectively lane-padded)
# ----------------------------------------------------------------------------
def make_linear_params(key, d_in, d_out, *, pad_in_to=None, pad_out_to=None,
                       w_dtype=jnp.bfloat16, b_dtype=jnp.float32):
    """nn.Linear-style params stored as W[pad_in_to, pad_out_to] (bf16) and
    b[1, pad_out_to] (f32), zero-padded to the requested extents."""
    pad_in_to = d_in if pad_in_to is None else pad_in_to
    pad_out_to = d_out if pad_out_to is None else pad_out_to
    kw, kb = jax.random.split(key)
    bound = 1.0 / (d_in ** 0.5)
    w = jax.random.uniform(kw, (d_in, d_out), jnp.float32, -bound, bound)
    b = jax.random.uniform(kb, (1, d_out), jnp.float32, -bound, bound)
    w = jnp.pad(w, ((0, pad_in_to - d_in), (0, pad_out_to - d_out))).astype(w_dtype)
    b = jnp.pad(b, ((0, 0), (0, pad_out_to - d_out))).astype(b_dtype)
    return w, b


if __name__ == "__main__":
    key = jax.random.PRNGKey(0)
    k_x, k_l1, k_l2 = jax.random.split(key, 3)

    # Small logical shapes.  Hidden/output feature dims are padded to 128 lanes;
    # the input feature dim is NOT padded (kernel block == full D_in).
    batch, d_in, hidden, d_out = 1000, 32, 64, 32
    hidden_p = _round_up(hidden, LANE)
    d_out_p = _round_up(d_out, LANE)

    # "ModuleDict": two linear layers (bf16 weights, f32 bias).
    w1, b1 = make_linear_params(k_l1, d_in, hidden, pad_out_to=hidden_p)
    w2, b2 = make_linear_params(k_l2, hidden, d_out,
                                pad_in_to=hidden_p, pad_out_to=d_out_p)

    modules = {
        "hidden": lambda xb: jnp.maximum(
            jnp.dot(xb, w1, preferred_element_type=jnp.float32) + b1, 0.0),
        "out": lambda hp: jnp.dot(hp.astype(jnp.bfloat16), w2,
                                  preferred_element_type=jnp.float32) + b2,
    }

    # The wrapped callable f: cast x to bf16 on the JAX side (fused by XLA),
    # run the fused Pallas kernel on the unpadded input, slice the lane-padded
    # output back to the logical width.
    @jax.jit
    def f(x):
        xb = x.astype(jnp.bfloat16)
        yp = fused_mlp(xb, w1, b1, w2, b2)          # default block_b=512
        return yp[:, :d_out]

    model = Wrapper(f, modules)

    x = jax.random.normal(k_x, (batch, d_in), jnp.float32)
    y = jax.block_until_ready(model(x))
    assert y.shape == (batch, d_out)

    # Reference with identical bf16/f32 mixed precision, built from the module dict.
    ref = modules["out"](modules["hidden"](x.astype(jnp.bfloat16)))[:, :d_out]
    ref = ref.astype(y.dtype)
    assert jnp.allclose(y.astype(jnp.float32), ref.astype(jnp.float32),
                        atol=1e-2, rtol=1e-2), float(
        jnp.max(jnp.abs(y.astype(jnp.float32) - ref.astype(jnp.float32))))

    print("KERNEL_OK")
</pallas_src>

<mosaic_0001>
module attributes {stable_mosaic.version = 11 : i64} {
  func.func @_mlp_kernel(%arg0: i32, %arg1: memref<512x32xbf16, #tpu.memory_space<vmem>>, %arg2: memref<32x128xbf16, #tpu.memory_space<vmem>>, %arg3: memref<1x128xf32, #tpu.memory_space<vmem>>, %arg4: memref<128x128xbf16, #tpu.memory_space<vmem>>, %arg5: memref<1x128xf32, #tpu.memory_space<vmem>>, %arg6: memref<512x128xbf16, #tpu.memory_space<vmem>>) attributes {dimension_semantics = [#tpu.dimension_semantics<parallel>], iteration_bounds = array<i64: 2>, scalar_prefetch = 0 : i64, scratch_operands = 0 : i64, tpu.core_type = #tpu.core_type<tc>, window_params = [{transform_indices = @transform_0, window_bounds = array<i64: 512, 32>}, {pipeline_mode = #tpu.pipeline_mode<synchronous>, transform_indices = @transform_1, window_bounds = array<i64: 32, 128>}, {pipeline_mode = #tpu.pipeline_mode<synchronous>, transform_indices = @transform_2, window_bounds = array<i64: 1, 128>}, {pipeline_mode = #tpu.pipeline_mode<synchronous>, transform_indices = @transform_3, window_bounds = array<i64: 128, 128>}, {pipeline_mode = #tpu.pipeline_mode<synchronous>, transform_indices = @transform_4, window_bounds = array<i64: 1, 128>}, {transform_indices = @transform_5, window_bounds = array<i64: 512, 128>}]} {
    %c0 = arith.constant 0 : index
    %c0_0 = arith.constant 0 : index
    %0 = vector.load %arg1[%c0, %c0_0] : memref<512x32xbf16, #tpu.memory_space<vmem>>, vector<512x32xbf16>
    %c0_1 = arith.constant 0 : index
    %c0_2 = arith.constant 0 : index
    %1 = vector.load %arg2[%c0_1, %c0_2] : memref<32x128xbf16, #tpu.memory_space<vmem>>, vector<32x128xbf16>
    %cst = arith.constant dense<0.000000e+00> : vector<512x128xf32>
    %2 = tpu.matmul %0, %1, %cst {dimension_numbers = #tpu.dot_dimension_numbers<[1], [0], [0], [1], [0, 0, 1, 1], [], []>} : vector<512x32xbf16>, vector<32x128xbf16>, vector<512x128xf32> -> vector<512x128xf32>
    %c0_3 = arith.constant 0 : index
    %c0_4 = arith.constant 0 : index
    %3 = vector.load %arg3[%c0_3, %c0_4] : memref<1x128xf32, #tpu.memory_space<vmem>>, vector<1x128xf32>
    %4 = vector.broadcast %3 : vector<1x128xf32> to vector<512x128xf32>
    %5 = arith.addf %2, %4 : vector<512x128xf32>
    %cst_5 = arith.constant 0.000000e+00 : f32
    %6 = vector.broadcast %cst_5 : f32 to vector<512x128xf32>
    %7 = arith.maximumf %5, %6 : vector<512x128xf32>
    %8 = arith.truncf %7 : vector<512x128xf32> to vector<512x128xbf16>
    %c0_6 = arith.constant 0 : index
    %c0_7 = arith.constant 0 : index
    %9 = vector.load %arg4[%c0_6, %c0_7] : memref<128x128xbf16, #tpu.memory_space<vmem>>, vector<128x128xbf16>
    %cst_8 = arith.constant dense<0.000000e+00> : vector<512x128xf32>
    %10 = tpu.matmul %8, %9, %cst_8 {dimension_numbers = #tpu.dot_dimension_numbers<[1], [0], [0], [1], [0, 0, 1, 1], [], []>} : vector<512x128xbf16>, vector<128x128xbf16>, vector<512x128xf32> -> vector<512x128xf32>
    %c0_9 = arith.constant 0 : index
    %c0_10 = arith.constant 0 : index
    %11 = vector.load %arg5[%c0_9, %c0_10] : memref<1x128xf32, #tpu.memory_space<vmem>>, vector<1x128xf32>
    %12 = vector.broadcast %11 : vector<1x128xf32> to vector<512x128xf32>
    %13 = arith.addf %10, %12 : vector<512x128xf32>
    %14 = arith.truncf %13 : vector<512x128xf32> to vector<512x128xbf16>
    %c0_11 = arith.constant 0 : index
    %c0_12 = arith.constant 0 : index
    %15 = vector.load %arg6[%c0_11, %c0_12] : memref<512x128xbf16, #tpu.memory_space<vmem>>, vector<512x128xbf16>
    tpu.vector_store %arg6[%c0_11, %c0_12], %14 {strides = array<i32>} : memref<512x128xbf16, #tpu.memory_space<vmem>>, vector<512x128xbf16>,
    return
  }
  func.func @transform_0(%arg0: i32) -> (i32, i32) {
    %c0_i32 = arith.constant 0 : i32
    %c0_i32_0 = arith.constant 0 : i32
    return %arg0, %c0_i32 : i32, i32
  }
  func.func @transform_1(%arg0: i32) -> (i32, i32) {
    %c0_i32 = arith.constant 0 : i32
    %c0_i32_0 = arith.constant 0 : i32
    %c0_i32_1 = arith.constant 0 : i32
    return %c0_i32, %c0_i32_0 : i32, i32
  }
  func.func @transform_2(%arg0: i32) -> (i32, i32) {
    %c0_i32 = arith.constant 0 : i32
    %c0_i32_0 = arith.constant 0 : i32
    %c0_i32_1 = arith.constant 0 : i32
    return %c0_i32, %c0_i32_0 : i32, i32
  }
  func.func @transform_3(%arg0: i32) -> (i32, i32) {
    %c0_i32 = arith.constant 0 : i32
    %c0_i32_0 = arith.constant 0 : i32
    %c0_i32_1 = arith.constant 0 : i32
    return %c0_i32, %c0_i32_0 : i32, i32
  }
  func.func @transform_4(%arg0: i32) -> (i32, i32) {
    %c0_i32 = arith.constant 0 : i32
    %c0_i32_0 = arith.constant 0 : i32
    %c0_i32_1 = arith.constant 0 : i32
    return %c0_i32, %c0_i32_0 : i32, i32
  }
  func.func @transform_5(%arg0: i32) -> (i32, i32) {
    %c0_i32 = arith.constant 0 : i32
    %c0_i32_0 = arith.constant 0 : i32
    return %arg0, %c0_i32 : i32, i32
  }
}

</mosaic_0001>

<llo_original>
// kernel: f.1
$region0: #{f.1}
  #allocation0 [shape = 'u32[]', space=smem, size = 0x4, offset = 0x4, fixed_abs, tag = 'smem constant byte address 0x4 - core index']
  #allocation1 [shape = 'u32[72,128]{1,0:T(1,128)}', space=vmem, size = 0x9000, scoped, tag = 'internal scratch']
  %s0 = inlined_call_operand.vmem [shape: bf16[1000,32], index: 0, kind: input, shape index: {}]
  %s1 = inlined_call_operand.vmem [shape: bf16[32,128], index: 1, kind: input, shape index: {}]
  %s2 = inlined_call_operand.vmem [shape: f32[1,128], index: 2, kind: input, shape index: {}]
  %s3 = inlined_call_operand.vmem [shape: bf16[128,128], index: 3, kind: input, shape index: {}]
  %s4 = inlined_call_operand.vmem [shape: f32[1,128], index: 4, kind: input, shape index: {}]
  %s5 = inlined_call_operand.vmem [shape: bf16[1000,128], index: 5, kind: output, shape index: {}]
  %s6 = sld [smem:[#allocation0]]
  $region97: #{f.1} parent=0
    _
  %s8 = ssub.s32 1, %s6
  %s9 = scalar_select 0, %s8, %s6
  $region1: #{f.1} parent=0
    #allocation2 [shape = 'u8[262144]{0}', space=vmem, size = 0x40000, scoped, tag = 'output window, operand 0']
    loop: start=0, step=1, limit=4
    $region2: #{f.1} parent=1 // loop_pre_header
      _
    $region3: #{f.1} parent=1 // loop_header
      %s11 = sphi 0, %s15
      %p12 = scmp.ge.s32.totalorder %s11, 4
      %s21 = sphi 0, %s23
      %s24 = sphi 0, %s21
      %s25 = sphi 0, %s24
      %s41 = sphi 0, %s25
      %s45 = sphi 0, %s45
      %s47 = sphi 0, %s45
      %s48 = sphi 0, %s47
      %s62 = sphi 0, %s48
      %s66 = sphi 0, %s66
      %s68 = sphi 0, %s66
      %s69 = sphi 0, %s68
      %s83 = sphi 0, %s69
      %s87 = sphi 0, %s87
      %s89 = sphi 0, %s87
      %s90 = sphi 0, %s89
      %s104 = sphi 0, %s90
      %s108 = sphi 0, %s108
      %s110 = sphi 0, %s108
      %s111 = sphi 0, %s110
      %s125 = sphi 0, %s111
      %s131 = sphi 0, %s133
      %s134 = sphi 0, %s131
      %s135 = sphi 0, %s134
      %s151 = sphi 0, %s135
    $region4: #{f.1} parent=1 // loop_header_branch
      %14 = sbr.rel (%p12) target = $region8
    $region5: #{f.1} parent=1 // loop_body
      %s16 = ssub.s32 %s11, 1
      %s17 = ssub.s32 %s11, 2
      %s18 = sadd.s32 %s11, 1
      %s19 = ssub.s32 %s11, %s18
      %p20 = scmp.eq.s32.totalorder %s19, 0
      %s22 = sadd.s32 %s21, 1
      %s23 = scalar_select %p20, %s21, %s22
      %p26 = pneg %p20
      %p27 = scmp.eq.s32.totalorder %s11, 1
      %p28 = por %p26, %p27
      %p29 = scmp.ne.s32.totalorder %s21, %s24
      %p30 = scmp.eq.s32.totalorder %s11, 0
      %p31 = por %p29, %p30
      %p32 = scmp.ne.s32.totalorder %s21, %s24
      %p33 = scmp.eq.s32.totalorder %s16, 1
      %p34 = por %p32, %p33
      %p35 = scmp.ne.s32.totalorder %s24, %s25
      %p36 = scmp.eq.s32.totalorder %s16, 0
      %p37 = por %p35, %p36
      %p38 = scmp.ne.s32.totalorder %s24, %s25
      %p39 = scmp.eq.s32.totalorder %s17, 1
      %p40 = por %p38, %p39
      %p42 = scmp.ne.s32.totalorder %s25, %s41
      %p43 = scmp.eq.s32.totalorder %s17, 0
      %p44 = por %p42, %p43
      %s46 = sadd.s32 %s45, 1
      %p49 = scmp.eq.s32.totalorder %s11, 1
      %p50 = scmp.ne.s32.totalorder %s45, %s47
      %p51 = scmp.eq.s32.totalorder %s11, 0
      %p52 = por %p50, %p51
      %p53 = scmp.ne.s32.totalorder %s45, %s47
      %p54 = scmp.eq.s32.totalorder %s16, 1
      %p55 = por %p53, %p54
      %p56 = scmp.ne.s32.totalorder %s47, %s48
      %p57 = scmp.eq.s32.totalorder %s16, 0
      %p58 = por %p56, %p57
      %p59 = scmp.ne.s32.totalorder %s47, %s48
      %p60 = scmp.eq.s32.totalorder %s17, 1
      %p61 = por %p59, %p60
      %p63 = scmp.ne.s32.totalorder %s48, %s62
      %p64 = scmp.eq.s32.totalorder %s17, 0
      %p65 = por %p63, %p64
      %s67 = sadd.s32 %s66, 1
      %p70 = scmp.eq.s32.totalorder %s11, 1
      %p71 = scmp.ne.s32.totalorder %s66, %s68
      %p72 = scmp.eq.s32.totalorder %s11, 0
      %p73 = por %p71, %p72
      %p74 = scmp.ne.s32.totalorder %s66, %s68
      %p75 = scmp.eq.s32.totalorder %s16, 1
      %p76 = por %p74, %p75
      %p77 = scmp.ne.s32.totalorder %s68, %s69
      %p78 = scmp.eq.s32.totalorder %s16, 0
      %p79 = por %p77, %p78
      %p80 = scmp.ne.s32.totalorder %s68, %s69
      %p81 = scmp.eq.s32.totalorder %s17, 1
      %p82 = por %p80, %p81
      %p84 = scmp.ne.s32.totalorder %s69, %s83
      %p85 = scmp.eq.s32.totalorder %s17, 0
      %p86 = por %p84, %p85
      %s88 = sadd.s32 %s87, 1
      %p91 = scmp.eq.s32.totalorder %s11, 1
      %p92 = scmp.ne.s32.totalorder %s87, %s89
      %p93 = scmp.eq.s32.totalorder %s11, 0
      %p94 = por %p92, %p93
      %p95 = scmp.ne.s32.totalorder %s87, %s89
      %p96 = scmp.eq.s32.totalorder %s16, 1
      %p97 = por %p95, %p96
      %p98 = scmp.ne.s32.totalorder %s89, %s90
      %p99 = scmp.eq.s32.totalorder %s16, 0
      %p100 = por %p98, %p99
      %p101 = scmp.ne.s32.totalorder %s89, %s90
      %p102 = scmp.eq.s32.totalorder %s17, 1
      %p103 = por %p101, %p102
      %p105 = scmp.ne.s32.totalorder %s90, %s104
      %p106 = scmp.eq.s32.totalorder %s17, 0
      %p107 = por %p105, %p106
      %s109 = sadd.s32 %s108, 1
      %p112 = scmp.eq.s32.totalorder %s11, 1
      %p113 = scmp.ne.s32.totalorder %s108, %s110
      %p114 = scmp.eq.s32.totalorder %s11, 0
      %p115 = por %p113, %p114
      %p116 = scmp.ne.s32.totalorder %s108, %s110
      %p117 = scmp.eq.s32.totalorder %s16, 1
      %p118 = por %p116, %p117
      %p119 = scmp.ne.s32.totalorder %s110, %s111
      %p120 = scmp.eq.s32.totalorder %s16, 0
      %p121 = por %p119, %p120
      %p122 = scmp.ne.s32.totalorder %s110, %s111
      %p123 = scmp.eq.s32.totalorder %s17, 1
      %p124 = por %p122, %p123
      %p126 = scmp.ne.s32.totalorder %s111, %s125
      %p127 = scmp.eq.s32.totalorder %s17, 0
      %p128 = por %p126, %p127
      %s129 = ssub.s32 %s11, %s18
      %p130 = scmp.eq.s32.totalorder %s129, 0
      %s132 = sadd.s32 %s131, 1
      %s133 = scalar_select %p130, %s131, %s132
      %p136 = pneg %p130
      %p137 = scmp.eq.s32.totalorder %s11, 1
      %p138 = por %p136, %p137
      %p139 = scmp.ne.s32.totalorder %s131, %s134
      %p140 = scmp.eq.s32.totalorder %s11, 0
      %p141 = por %p139, %p140
      %p142 = scmp.ne.s32.totalorder %s131, %s134
      %p143 = scmp.eq.s32.totalorder %s16, 1
      %p144 = por %p142, %p143
      %p145 = scmp.ne.s32.totalorder %s134, %s135
      %p146 = scmp.eq.s32.totalorder %s16, 0
      %p147 = por %p145, %p146
      %p148 = scmp.ne.s32.totalorder %s134, %s135
      %p149 = scmp.eq.s32.totalorder %s17, 1
      %p150 = por %p148, %p149
      %p152 = scmp.ne.s32.totalorder %s135, %s151
      %p153 = scmp.eq.s32.totalorder %s17, 0
      %p154 = por %p152, %p153
      %p155 = scmp.le.s32.totalorder 1, %s11
      %p156 = scmp.lt.s32.totalorder %s11, 3
      %p157 = pnand %p155, %p156
      %p158 = pneg %p157
      // Predicated region
      $region9: #{f.1} parent=5 // pred_check
        _
      $region10: #{f.1} parent=5 // pred_check_branch
        %160 = sbr.rel (%p157) target = $region12
      $region11: #{f.1} parent=5 // pred_region
        %s161 = ssub.s32 %s11, 1
        // Predicated region
        $region13: #{f.1} parent=11 // pred_check
          %p162 = pneg %p58
        $region14: #{f.1} parent=11 // pred_check_branch
          %164 = sbr.rel (%p162) target = $region16
        $region15: #{f.1} parent=11 // pred_region
          _
        $region16: #{f.1} parent=11 // pred_fallthru
          _
        // Predicated region
        $region17: #{f.1} parent=11 // pred_check
          %p165 = pneg %p79
        $region18: #{f.1} parent=11 // pred_check_branch
          %167 = sbr.rel (%p165) target = $region20
        $region19: #{f.1} parent=11 // pred_region
          _
        $region20: #{f.1} parent=11 // pred_fallthru
          _
        // Predicated region
        $region21: #{f.1} parent=11 // pred_check
          %p168 = pneg %p100
        $region22: #{f.1} parent=11 // pred_check_branch
          %170 = sbr.rel (%p168) target = $region24
        $region23: #{f.1} parent=11 // pred_region
          _
        $region24: #{f.1} parent=11 // pred_fallthru
          _
        // Predicated region
        $region25: #{f.1} parent=11 // pred_check
          %p171 = pneg %p121
        $region26: #{f.1} parent=11 // pred_check_branch
          %173 = sbr.rel (%p171) target = $region28
        $region27: #{f.1} parent=11 // pred_region
          _
        $region28: #{f.1} parent=11 // pred_fallthru
          _
      $region12: #{f.1} parent=5 // pred_fallthru
        _
      %p174 = scmp.lt.s32.totalorder %s11, 2
      // Predicated region
      $region29: #{f.1} parent=5 // pred_check
        %p175 = pneg %p174
      $region30: #{f.1} parent=5 // pred_check_branch
        %177 = sbr.rel (%p175) target = $region32
      $region31: #{f.1} parent=5 // pred_region
        // Predicated region
        $region33: #{f.1} parent=31 // pred_check
          %p178 = pneg %p31
        $region34: #{f.1} parent=31 // pred_check_branch
          %180 = sbr.rel (%p178) target = $region36
        $region35: #{f.1} parent=31 // pred_region
          %s181 = smul.u32 64, %s11
          %s182 = ssub.s32 125, %s181
          %p183 = scmp.lt.s32.totalorder %s182, 64
          %s184 = scalar_select %p183, %s182, 64
          %s185 = smul.u32 4, %s184
          %p186 = scmp.lt.s32.totalorder %s181, 124
          %s187 = scalar_select %p186, %s181, 124
          %s188 = smul.addr %s187, 4
          %s189 = scalar_lea.vmem %s0, %s188
          %s190 = smul.u32 64, %s11
          %s191 = ssub.s32 125, %s190
          %p192 = scmp.lt.s32.totalorder %s191, 64
          %s193 = scalar_select %p192, %s191, 64
          %s194 = smul.u32 4, %s193
        $region36: #{f.1} parent=31 // pred_fallthru
          _
      $region32: #{f.1} parent=5 // pred_fallthru
        _
      %p195 = scmp.le.s32.totalorder 1, %s11
      %p196 = scmp.lt.s32.totalorder %s11, 3
      %p197 = pnand %p195, %p196
      %p198 = pneg %p197
      // Predicated region
      $region37: #{f.1} parent=5 // pred_check
        _
      $region38: #{f.1} parent=5 // pred_check_branch
        %200 = sbr.rel (%p197) target = $region40
      $region39: #{f.1} parent=5 // pred_region
        %s201 = ssub.s32 %s11, 1
        %s202 = smul.u32 64, %s16
        %s203 = ssub.s32 125, %s202
        %p204 = scmp.lt.s32.totalorder %s203, 64
        %s205 = scalar_select %p204, %s203, 64
        %s206 = smul.u32 4, %s205
        %p207 = scmp.lt.s32.totalorder %s202, 124
        %s208 = scalar_select %p207, %s202, 124
        %s209 = smul.addr %s208, 4
        %s210 = scalar_lea.vmem %s0, %s209
        %p211 = pneg %p37
        %p212 = pneg %p34
        %p213 = pneg %p58
        %p214 = pneg %p55
        %p215 = pneg %p79
        %p216 = pneg %p76
        %p217 = pneg %p100
        %p218 = pneg %p97
        %p219 = pneg %p121
        %p220 = pneg %p118
        %p221 = pneg %p147
        %p222 = pneg %p144
        %s223 = sand.u32 %s134, 1
        %s224 = sand.u32 %s134, 1
        %s225 = smul.addr %s224, 256
        %s226 = scalar_lea.vmem [#allocation2], %s225
        %s227 = smul.u32 64, %s16
        %s228 = ssub.s32 125, %s227
        %p229 = scmp.lt.s32.totalorder %s228, 64
        %s230 = scalar_select %p229, %s228, 64
        %s231 = smul.u32 4, %s230
        %p232 = scmp.lt.s32.totalorder %s227, 124
        %s233 = scalar_select %p232, %s227, 124
        %s234 = smul.addr %s233, 4
        %s235 = scalar_lea.vmem %s0, %s234
        %s236 = smul.u32 64, %s16
        %s237 = ssub.s32 125, %s236
        %p238 = scmp.lt.s32.totalorder %s237, 64
        %s239 = scalar_select %p238, %s237, 64
        %s240 = smul.u32 4, %s239
        %s241 = smul.u32 64, %s16
        %s242 = ssub.s32 125, %s241
        %p243 = scmp.lt.s32.totalorder %s242, 64
        %s244 = scalar_select %p243, %s242, 64
        %s245 = smul.u32 4, %s244
        %v247 = vld [vmem:[%s235] sm:$0xf]
        %v248 = vld [vmem:[%s235 + $0x4] sm:$0xf]
        %v249 = vld [vmem:[%s235 + $0x8] sm:$0xf]
        %v250 = vld [vmem:[%s235 + $0xc] sm:$0xf]
        %v251 = vld [vmem:[%s235 + $0x10] sm:$0xf]
        %v252 = vld [vmem:[%s235 + $0x14] sm:$0xf]
        %v253 = vld [vmem:[%s235 + $0x18] sm:$0xf]
        %v254 = vld [vmem:[%s235 + $0x1c] sm:$0xf]
        %v255 = vld [vmem:[%s235 + $0x20] sm:$0xf]
        %v256 = vld [vmem:[%s235 + $0x24] sm:$0xf]
        %v257 = vld [vmem:[%s235 + $0x28] sm:$0xf]
        %v258 = vld [vmem:[%s235 + $0x2c] sm:$0xf]
        %v259 = vld [vmem:[%s235 + $0x30] sm:$0xf]
        %v260 = vld [vmem:[%s235 + $0x34] sm:$0xf]
        %v261 = vld [vmem:[%s235 + $0x38] sm:$0xf]
        %v262 = vld [vmem:[%s235 + $0x3c] sm:$0xf]
        %v263 = vld [vmem:[%s235 + $0x40] sm:$0xf]
        %v264 = vld [vmem:[%s235 + $0x44] sm:$0xf]
        %v265 = vld [vmem:[%s235 + $0x48] sm:$0xf]
        %v266 = vld [vmem:[%s235 + $0x4c] sm:$0xf]
        %v267 = vld [vmem:[%s235 + $0x50] sm:$0xf]
        %v268 = vld [vmem:[%s235 + $0x54] sm:$0xf]
        %v269 = vld [vmem:[%s235 + $0x58] sm:$0xf]
        %v270 = vld [vmem:[%s235 + $0x5c] sm:$0xf]
        %v271 = vld [vmem:[%s235 + $0x60] sm:$0xf]
        %v272 = vld [vmem:[%s235 + $0x64] sm:$0xf]
        %v273 = vld [vmem:[%s235 + $0x68] sm:$0xf]
        %v274 = vld [vmem:[%s235 + $0x6c] sm:$0xf]
        %v275 = vld [vmem:[%s235 + $0x70] sm:$0xf]
        %v276 = vld [vmem:[%s235 + $0x74] sm:$0xf]
        %v277 = vld [vmem:[%s235 + $0x78] sm:$0xf]
        %v278 = vld [vmem:[%s235 + $0x7c] sm:$0xf]
        %v279 = vld [vmem:[%s235 + $0x80] sm:$0xf]
        %v280 = vld [vmem:[%s235 + $0x84] sm:$0xf]
        %v281 = vld [vmem:[%s235 + $0x88] sm:$0xf]
        %v282 = vld [vmem:[%s235 + $0x8c] sm:$0xf]
        %v283 = vld [vmem:[%s235 + $0x90] sm:$0xf]
        %v284 = vld [vmem:[%s235 + $0x94] sm:$0xf]
        %v285 = vld [vmem:[%s235 + $0x98] sm:$0xf]
        %v286 = vld [vmem:[%s235 + $0x9c] sm:$0xf]
        %v287 = vld [vmem:[%s235 + $0xa0] sm:$0xf]
        %v288 = vld [vmem:[%s235 + $0xa4] sm:$0xf]
        %v289 = vld [vmem:[%s235 + $0xa8] sm:$0xf]
        %v290 = vld [vmem:[%s235 + $0xac] sm:$0xf]
        %v291 = vld [vmem:[%s235 + $0xb0] sm:$0xf]
        %v292 = vld [vmem:[%s235 + $0xb4] sm:$0xf]
        %v293 = vld [vmem:[%s235 + $0xb8] sm:$0xf]
        %v294 = vld [vmem:[%s235 + $0xbc] sm:$0xf]
        %v295 = vld [vmem:[%s235 + $0xc0] sm:$0xf]
        %v296 = vld [vmem:[%s235 + $0xc4] sm:$0xf]
        %v297 = vld [vmem:[%s235 + $0xc8] sm:$0xf]
        %v298 = vld [vmem:[%s235 + $0xcc] sm:$0xf]
        %v299 = vld [vmem:[%s235 + $0xd0] sm:$0xf]
        %v300 = vld [vmem:[%s235 + $0xd4] sm:$0xf]
        %v301 = vld [vmem:[%s235 + $0xd8] sm:$0xf]
        %v302 = vld [vmem:[%s235 + $0xdc] sm:$0xf]
        %v303 = vld [vmem:[%s235 + $0xe0] sm:$0xf]
        %v304 = vld [vmem:[%s235 + $0xe4] sm:$0xf]
        %v305 = vld [vmem:[%s235 + $0xe8] sm:$0xf]
        %v306 = vld [vmem:[%s235 + $0xec] sm:$0xf]
        %v307 = vld [vmem:[%s235 + $0xf0] sm:$0xf]
        %v308 = vld [vmem:[%s235 + $0xf4] sm:$0xf]
        %v309 = vld [vmem:[%s235 + $0xf8] sm:$0xf]
        %v310 = vld [vmem:[%s235 + $0xfc] sm:$0xf]
        %v311 = vld [vmem:[%s1] sm:$0xf]
        %v312 = vld [vmem:[%s1 + $0x4] sm:$0xf]
        %v313 = vld [vmem:[%s1 + $0x8] sm:$0xf]
        %v314 = vld [vmem:[%s1 + $0xc] sm:$0xf]
        %v315 = vld [vmem:[%s2] sm:$0x1]
        %v317 = vperm.slane %v315, 0
        %v383 = vunpack.c.l.b16 %v247
        %v384 = vunpack.c.l.b16 %v248
        %v385 = vunpack.c.l.b16 %v249
        %v386 = vunpack.c.l.b16 %v250
        %v387 = vunpack.c.l.b16 %v251
        %v388 = vunpack.c.l.b16 %v252
        %v389 = vunpack.c.l.b16 %v253
        %v390 = vunpack.c.l.b16 %v254
        %v391 = vunpack.c.l.b16 %v255
        %v392 = vunpack.c.l.b16 %v256
        %v393 = vunpack.c.l.b16 %v257
        %v394 = vunpack.c.l.b16 %v258
        %v395 = vunpack.c.l.b16 %v259
        %v396 = vunpack.c.l.b16 %v260
        %v397 = vunpack.c.l.b16 %v261
        %v398 = vunpack.c.l.b16 %v262
        %v399 = vunpack.c.l.b16 %v263
        %v400 = vunpack.c.l.b16 %v264
        %v401 = vunpack.c.l.b16 %v265
        %v402 = vunpack.c.l.b16 %v266
        %v403 = vunpack.c.l.b16 %v267
        %v404 = vunpack.c.l.b16 %v268
        %v405 = vunpack.c.l.b16 %v269
        %v406 = vunpack.c.l.b16 %v270
        %v407 = vunpack.c.l.b16 %v271
        %v408 = vunpack.c.l.b16 %v272
        %v409 = vunpack.c.l.b16 %v273
        %v410 = vunpack.c.l.b16 %v274
        %v411 = vunpack.c.l.b16 %v275
        %v412 = vunpack.c.l.b16 %v276
        %v413 = vunpack.c.l.b16 %v277
        %v414 = vunpack.c.l.b16 %v278
        %v415 = vunpack.c.l.b16 %v279
        %v416 = vunpack.c.l.b16 %v280
        %v417 = vunpack.c.l.b16 %v281
        %v418 = vunpack.c.l.b16 %v282
        %v419 = vunpack.c.l.b16 %v283
        %v420 = vunpack.c.l.b16 %v284
        %v421 = vunpack.c.l.b16 %v285
        %v422 = vunpack.c.l.b16 %v286
        %v423 = vunpack.c.l.b16 %v287
        %v424 = vunpack.c.l.b16 %v288
        %v425 = vunpack.c.l.b16 %v289
        %v426 = vunpack.c.l.b16 %v290
        %v427 = vunpack.c.l.b16 %v291
        %v428 = vunpack.c.l.b16 %v292
        %v429 = vunpack.c.l.b16 %v293
        %v430 = vunpack.c.l.b16 %v294
        %v431 = vunpack.c.l.b16 %v295
        %v432 = vunpack.c.l.b16 %v296
        %v433 = vunpack.c.l.b16 %v297
        %v434 = vunpack.c.l.b16 %v298
        %v435 = vunpack.c.l.b16 %v299
        %v436 = vunpack.c.l.b16 %v300
        %v437 = vunpack.c.l.b16 %v301
        %v438 = vunpack.c.l.b16 %v302
        %v439 = vunpack.c.l.b16 %v303
        %v440 = vunpack.c.l.b16 %v304
        %v441 = vunpack.c.l.b16 %v305
        %v442 = vunpack.c.l.b16 %v306
        %v443 = vunpack.c.l.b16 %v307
        %v444 = vunpack.c.l.b16 %v308
        %v445 = vunpack.c.l.b16 %v309
        %v446 = vunpack.c.l.b16 %v310
        %v447 = vpack.c.b16 %v384, %v383
        %v448 = vpack.c.b16 %v386, %v385
        %v449 = vpack.c.b16 %v388, %v387
        %v450 = vpack.c.b16 %v390, %v389
        %v451 = vpack.c.b16 %v392, %v391
        %v452 = vpack.c.b16 %v394, %v393
        %v453 = vpack.c.b16 %v396, %v395
        %v454 = vpack.c.b16 %v398, %v397
        %v455 = vpack.c.b16 %v400, %v399
        %v456 = vpack.c.b16 %v402, %v401
        %v457 = vpack.c.b16 %v404, %v403
        %v458 = vpack.c.b16 %v406, %v405
        %v459 = vpack.c.b16 %v408, %v407
        %v460 = vpack.c.b16 %v410, %v409
        %v461 = vpack.c.b16 %v412, %v411
        %v462 = vpack.c.b16 %v414, %v413
        %v463 = vpack.c.b16 %v416, %v415
        %v464 = vpack.c.b16 %v418, %v417
        %v465 = vpack.c.b16 %v420, %v419
        %v466 = vpack.c.b16 %v422, %v421
        %v467 = vpack.c.b16 %v424, %v423
        %v468 = vpack.c.b16 %v426, %v425
        %v469 = vpack.c.b16 %v428, %v427
        %v470 = vpack.c.b16 %v430, %v429
        %v471 = vpack.c.b16 %v432, %v431
        %v472 = vpack.c.b16 %v434, %v433
        %v473 = vpack.c.b16 %v436, %v435
        %v474 = vpack.c.b16 %v438, %v437
        %v475 = vpack.c.b16 %v440, %v439
        %v476 = vpack.c.b16 %v442, %v441
        %v477 = vpack.c.b16 %v444, %v443
        %v478 = vpack.c.b16 %v446, %v445
        %v483 = vunpack.c.l.b16 %v311
        %v484 = vunpack.c.l.b16 %v312
        %v485 = vunpack.c.l.b16 %v313
        %v486 = vunpack.c.l.b16 %v314
        %v487 = vpack.c.b16 %v484, %v483
        %v488 = vpack.c.b16 %v486, %v485
        %vm491 = vcmask 261120
        %v493 = vsel %vm491, %v447, 0
        %v496 = vsel %vm491, %v448, 0
        %v499 = vsel %vm491, %v449, 0
        %v502 = vsel %vm491, %v450, 0
        %v505 = vsel %vm491, %v451, 0
        %v508 = vsel %vm491, %v452, 0
        %v511 = vsel %vm491, %v453, 0
        %v514 = vsel %vm491, %v454, 0
        %v517 = vsel %vm491, %v455, 0
        %v520 = vsel %vm491, %v456, 0
        %v523 = vsel %vm491, %v457, 0
        %v526 = vsel %vm491, %v458, 0
        %v529 = vsel %vm491, %v459, 0
        %v532 = vsel %vm491, %v460, 0
        %v535 = vsel %vm491, %v461, 0
        %v538 = vsel %vm491, %v462, 0
        %v541 = vsel %vm491, %v463, 0
        %v544 = vsel %vm491, %v464, 0
        %v547 = vsel %vm491, %v465, 0
        %v550 = vsel %vm491, %v466, 0
        %v553 = vsel %vm491, %v467, 0
        %v556 = vsel %vm491, %v468, 0
        %v559 = vsel %vm491, %v469, 0
        %v562 = vsel %vm491, %v470, 0
        %v565 = vsel %vm491, %v471, 0
        %v568 = vsel %vm491, %v472, 0
        %v571 = vsel %vm491, %v473, 0
        %v574 = vsel %vm491, %v474, 0
        %v577 = vsel %vm491, %v475, 0
        %v580 = vsel %vm491, %v476, 0
        %v583 = vsel %vm491, %v477, 0
        %v586 = vsel %vm491, %v478, 0
        %588 = vmatpush.bf16.msra.mxu0 0
        %589 = vmatpush.bf16.msra.mxu0 0
        %590 = vmatpush.bf16.msra.mxu0 0
        %591 = vmatpush.bf16.msra.mxu0 0
        %592 = vmatpush.bf16.msra.mxu0 0
        %593 = vmatpush.bf16.msra.mxu0 0
        %594 = vmatpush.bf16.msra.mxu0 %v488
        %595 = vmatpush.bf16.msra.mxu0 %v487
        %596 = vmatmul.bf16.gmra.mxu0 %v493
        %v597 = vpop.f32.mrf.mxu0
        %v598 = vadd.f32 %v317, %v597
        %v599 = vpop.f32.mrf.mxu0
        %v600 = vadd.f32 %v317, %v599
        %601 = vmatmul.bf16.gmra.mxu0 %v496
        %v602 = vpop.f32.mrf.mxu0
        %v603 = vadd.f32 %v317, %v602
        %v604 = vpop.f32.mrf.mxu0
        %v605 = vadd.f32 %v317, %v604
        %606 = vmatmul.bf16.gmra.mxu0 %v499
        %v607 = vpop.f32.mrf.mxu0
        %v608 = vadd.f32 %v317, %v607
        %v609 = vpop.f32.mrf.mxu0
        %v610 = vadd.f32 %v317, %v609
        %611 = vmatmul.bf16.gmra.mxu0 %v502
        %v612 = vpop.f32.mrf.mxu0
        %v613 = vadd.f32 %v317, %v612
        %v614 = vpop.f32.mrf.mxu0
        %v615 = vadd.f32 %v317, %v614
        %616 = vmatmul.bf16.gmra.mxu0 %v505
        %v617 = vpop.f32.mrf.mxu0
        %v618 = vadd.f32 %v317, %v617
        %v619 = vpop.f32.mrf.mxu0
        %v620 = vadd.f32 %v317, %v619
        %621 = vmatmul.bf16.gmra.mxu0 %v508
        %v622 = vpop.f32.mrf.mxu0
        %v623 = vadd.f32 %v317, %v622
        %v624 = vpop.f32.mrf.mxu0
        %v625 = vadd.f32 %v317, %v624
        %626 = vmatmul.bf16.gmra.mxu0 %v511
        %v627 = vpop.f32.mrf.mxu0
        %v628 = vadd.f32 %v317, %v627
        %v629 = vpop.f32.mrf.mxu0
        %v630 = vadd.f32 %v317, %v629
        %631 = vmatmul.bf16.gmra.mxu0 %v514
        %v632 = vpop.f32.mrf.mxu0
        %v633 = vadd.f32 %v317, %v632
        %v634 = vpop.f32.mrf.mxu0
        %v635 = vadd.f32 %v317, %v634
        %636 = vmatmul.bf16.gmra.mxu0 %v517
        %v637 = vpop.f32.mrf.mxu0
        %v638 = vadd.f32 %v317, %v637
        %v639 = vpop.f32.mrf.mxu0
        %v640 = vadd.f32 %v317, %v639
        %641 = vmatmul.bf16.gmra.mxu0 %v520
        %v642 = vpop.f32.mrf.mxu0
        %v643 = vadd.f32 %v317, %v642
        %v644 = vpop.f32.mrf.mxu0
        %v645 = vadd.f32 %v317, %v644
        %646 = vmatmul.bf16.gmra.mxu0 %v523
        %v647 = vpop.f32.mrf.mxu0
        %v648 = vadd.f32 %v317, %v647
        %v649 = vpop.f32.mrf.mxu0
        %v650 = vadd.f32 %v317, %v649
        %651 = vmatmul.bf16.gmra.mxu0 %v526
        %v652 = vpop.f32.mrf.mxu0
        %v653 = vadd.f32 %v317, %v652
        %v654 = vpop.f32.mrf.mxu0
        %v655 = vadd.f32 %v317, %v654
        %656 = vmatmul.bf16.gmra.mxu0 %v529
        %v657 = vpop.f32.mrf.mxu0
        %v658 = vadd.f32 %v317, %v657
        %v659 = vpop.f32.mrf.mxu0
        %v660 = vadd.f32 %v317, %v659
        %661 = vmatmul.bf16.gmra.mxu0 %v532
        %v662 = vpop.f32.mrf.mxu0
        %v663 = vadd.f32 %v317, %v662
        %v664 = vpop.f32.mrf.mxu0
        %v665 = vadd.f32 %v317, %v664
        %666 = vmatmul.bf16.gmra.mxu0 %v535
        %v667 = vpop.f32.mrf.mxu0
        %v668 = vadd.f32 %v317, %v667
        %v669 = vpop.f32.mrf.mxu0
        %v670 = vadd.f32 %v317, %v669
        %671 = vmatmul.bf16.gmra.mxu0 %v538
        %v672 = vpop.f32.mrf.mxu0
        %v673 = vadd.f32 %v317, %v672
        %v674 = vpop.f32.mrf.mxu0
        %v675 = vadd.f32 %v317, %v674
        %676 = vmatmul.bf16.gmra.mxu0 %v541
        %v677 = vpop.f32.mrf.mxu0
        %v678 = vadd.f32 %v317, %v677
        %v679 = vpop.f32.mrf.mxu0
        %v680 = vadd.f32 %v317, %v679
        %681 = vmatmul.bf16.gmra.mxu0 %v544
        %v682 = vpop.f32.mrf.mxu0
        %v683 = vadd.f32 %v317, %v682
        %v684 = vpop.f32.mrf.mxu0
        %v685 = vadd.f32 %v317, %v684
        %686 = vmatmul.bf16.gmra.mxu0 %v547
        %v687 = vpop.f32.mrf.mxu0
        %v688 = vadd.f32 %v317, %v687
        %v689 = vpop.f32.mrf.mxu0
        %v690 = vadd.f32 %v317, %v689
        %691 = vmatmul.bf16.gmra.mxu0 %v550
        %v692 = vpop.f32.mrf.mxu0
        %v693 = vadd.f32 %v317, %v692
        %v694 = vpop.f32.mrf.mxu0
        %v695 = vadd.f32 %v317, %v694
        %696 = vmatmul.bf16.gmra.mxu0 %v553
        %v697 = vpop.f32.mrf.mxu0
        %v698 = vadd.f32 %v317, %v697
        %v699 = vpop.f32.mrf.mxu0
        %v700 = vadd.f32 %v317, %v699
        %701 = vmatmul.bf16.gmra.mxu0 %v556
        %v702 = vpop.f32.mrf.mxu0
        %v703 = vadd.f32 %v317, %v702
        %v704 = vpop.f32.mrf.mxu0
        %v705 = vadd.f32 %v317, %v704
        %706 = vmatmul.bf16.gmra.mxu0 %v559
        %v707 = vpop.f32.mrf.mxu0
        %v708 = vadd.f32 %v317, %v707
        %v709 = vpop.f32.mrf.mxu0
        %v710 = vadd.f32 %v317, %v709
        %711 = vmatmul.bf16.gmra.mxu0 %v562
        %v712 = vpop.f32.mrf.mxu0
        %v713 = vadd.f32 %v317, %v712
        %v714 = vpop.f32.mrf.mxu0
        %v715 = vadd.f32 %v317, %v714
        %716 = vmatmul.bf16.gmra.mxu0 %v565
        %v717 = vpop.f32.mrf.mxu0
        %v718 = vadd.f32 %v317, %v717
        %v719 = vpop.f32.mrf.mxu0
        %v720 = vadd.f32 %v317, %v719
        %721 = vmatmul.bf16.gmra.mxu0 %v568
        %v722 = vpop.f32.mrf.mxu0
        %v723 = vadd.f32 %v317, %v722
        %v724 = vpop.f32.mrf.mxu0
        %v725 = vadd.f32 %v317, %v724
        %726 = vmatmul.bf16.gmra.mxu0 %v571
        %v727 = vpop.f32.mrf.mxu0
        %v728 = vadd.f32 %v317, %v727
        %v729 = vpop.f32.mrf.mxu0
        %v730 = vadd.f32 %v317, %v729
        %731 = vmatmul.bf16.gmra.mxu0 %v574
        %v732 = vpop.f32.mrf.mxu0
        %v733 = vadd.f32 %v317, %v732
        %v734 = vpop.f32.mrf.mxu0
        %v735 = vadd.f32 %v317, %v734
        %736 = vmatmul.bf16.gmra.mxu0 %v577
        %v737 = vpop.f32.mrf.mxu0
        %v738 = vadd.f32 %v317, %v737
        %v739 = vpop.f32.mrf.mxu0
        %v740 = vadd.f32 %v317, %v739
        %741 = vmatmul.bf16.gmra.mxu0 %v580
        %v742 = vpop.f32.mrf.mxu0
        %v743 = vadd.f32 %v317, %v742
        %v744 = vpop.f32.mrf.mxu0
        %v745 = vadd.f32 %v317, %v744
        %746 = vmatmul.bf16.gmra.mxu0 %v583
        %v747 = vpop.f32.mrf.mxu0
        %v748 = vadd.f32 %v317, %v747
        %v749 = vpop.f32.mrf.mxu0
        %v750 = vadd.f32 %v317, %v749
        %751 = vmatmul.bf16.gmra.mxu0 %v586
        %v752 = vpop.f32.mrf.mxu0
        %v753 = vadd.f32 %v317, %v752
        %v754 = vpop.f32.mrf.mxu0
        %v755 = vadd.f32 %v317, %v754
        %756 = vdwg.mxu0
        %v757 = vmax.f32 %v598, 0.0
        %v758 = vmax.f32 %v600, 0.0
        %v759 = vmax.f32 %v603, 0.0
        %v760 = vmax.f32 %v605, 0.0
        %v761 = vmax.f32 %v608, 0.0
        %v762 = vmax.f32 %v610, 0.0
        %v763 = vmax.f32 %v613, 0.0
        %v764 = vmax.f32 %v615, 0.0
        %v765 = vmax.f32 %v618, 0.0
        %v766 = vmax.f32 %v620, 0.0
        %v767 = vmax.f32 %v623, 0.0
        %v768 = vmax.f32 %v625, 0.0
        %v769 = vmax.f32 %v628, 0.0
        %v770 = vmax.f32 %v630, 0.0
        %v771 = vmax.f32 %v633, 0.0
        %v772 = vmax.f32 %v635, 0.0
        %v773 = vmax.f32 %v638, 0.0
        %v774 = vmax.f32 %v640, 0.0
        %v775 = vmax.f32 %v643, 0.0
        %v776 = vmax.f32 %v645, 0.0
        %v777 = vmax.f32 %v648, 0.0
        %v778 = vmax.f32 %v650, 0.0
        %v779 = vmax.f32 %v653, 0.0
        %v780 = vmax.f32 %v655, 0.0
        %v781 = vmax.f32 %v658, 0.0
        %v782 = vmax.f32 %v660, 0.0
        %v783 = vmax.f32 %v663, 0.0
        %v784 = vmax.f32 %v665, 0.0
        %v785 = vmax.f32 %v668, 0.0
        %v786 = vmax.f32 %v670, 0.0
        %v787 = vmax.f32 %v673, 0.0
        %v788 = vmax.f32 %v675, 0.0
        %v789 = vmax.f32 %v678, 0.0
        %v790 = vmax.f32 %v680, 0.0
        %v791 = vmax.f32 %v683, 0.0
        %v792 = vmax.f32 %v685, 0.0
        %v793 = vmax.f32 %v688, 0.0
        %v794 = vmax.f32 %v690, 0.0
        %v795 = vmax.f32 %v693, 0.0
        %v796 = vmax.f32 %v695, 0.0
        %v797 = vmax.f32 %v698, 0.0
        %v798 = vmax.f32 %v700, 0.0
        %v799 = vmax.f32 %v703, 0.0
        %v800 = vmax.f32 %v705, 0.0
        %v801 = vmax.f32 %v708, 0.0
        %v802 = vmax.f32 %v710, 0.0
        %v803 = vmax.f32 %v713, 0.0
        %v804 = vmax.f32 %v715, 0.0
        %v805 = vmax.f32 %v718, 0.0
        %v806 = vmax.f32 %v720, 0.0
        %v807 = vmax.f32 %v723, 0.0
        %v808 = vmax.f32 %v725, 0.0
        %v809 = vmax.f32 %v728, 0.0
        %v810 = vmax.f32 %v730, 0.0
        %v811 = vmax.f32 %v733, 0.0
        %v812 = vmax.f32 %v735, 0.0
        %v813 = vmax.f32 %v738, 0.0
        %v814 = vmax.f32 %v740, 0.0
        %v815 = vmax.f32 %v743, 0.0
        %v816 = vmax.f32 %v745, 0.0
        %v817 = vmax.f32 %v748, 0.0
        %v818 = vmax.f32 %v750, 0.0
        %v819 = vmax.f32 %v753, 0.0
        %v820 = vmax.f32 %v755, 0.0
        %v821 = vpack.c.bf16 %v758, %v757
        %v822 = vpack.c.bf16 %v760, %v759
        %v823 = vpack.c.bf16 %v762, %v761
        %v824 = vpack.c.bf16 %v764, %v763
        %v825 = vpack.c.bf16 %v766, %v765
        %v826 = vpack.c.bf16 %v768, %v767
        %v827 = vpack.c.bf16 %v770, %v769
        %v828 = vpack.c.bf16 %v772, %v771
        %v829 = vpack.c.bf16 %v774, %v773
        %v830 = vpack.c.bf16 %v776, %v775
        %v831 = vpack.c.bf16 %v778, %v777
        %v832 = vpack.c.bf16 %v780, %v779
        %v833 = vpack.c.bf16 %v782, %v781
        %v834 = vpack.c.bf16 %v784, %v783
        %v835 = vpack.c.bf16 %v786, %v785
        %v836 = vpack.c.bf16 %v788, %v787
        %v837 = vpack.c.bf16 %v790, %v789
        %v838 = vpack.c.bf16 %v792, %v791
        %v839 = vpack.c.bf16 %v794, %v793
        %v840 = vpack.c.bf16 %v796, %v795
        %v841 = vpack.c.bf16 %v798, %v797
        %v842 = vpack.c.bf16 %v800, %v799
        %v843 = vpack.c.bf16 %v802, %v801
        %v844 = vpack.c.bf16 %v804, %v803
        %v845 = vpack.c.bf16 %v806, %v805
        %v846 = vpack.c.bf16 %v808, %v807
        %v847 = vpack.c.bf16 %v810, %v809
        %v848 = vpack.c.bf16 %v812, %v811
        %v849 = vpack.c.bf16 %v814, %v813
        %v850 = vpack.c.bf16 %v816, %v815
        %v851 = vpack.c.bf16 %v818, %v817
        %v852 = vpack.c.bf16 %v820, %v819
        %v853 = vld [vmem:[%s3] sm:$0xf]
        %v854 = vld [vmem:[%s3 + $0x4] sm:$0xf]
        %v855 = vld [vmem:[%s3 + $0x8] sm:$0xf]
        %v856 = vld [vmem:[%s3 + $0xc] sm:$0xf]
        %v857 = vld [vmem:[%s3 + $0x10] sm:$0xf]
        %v858 = vld [vmem:[%s3 + $0x14] sm:$0xf]
        %v859 = vld [vmem:[%s3 + $0x18] sm:$0xf]
        %v860 = vld [vmem:[%s3 + $0x1c] sm:$0xf]
        %v861 = vld [vmem:[%s3 + $0x20] sm:$0xf]
        %v862 = vld [vmem:[%s3 + $0x24] sm:$0xf]
        %v863 = vld [vmem:[%s3 + $0x28] sm:$0xf]
        %v864 = vld [vmem:[%s3 + $0x2c] sm:$0xf]
        %v865 = vld [vmem:[%s3 + $0x30] sm:$0xf]
        %v866 = vld [vmem:[%s3 + $0x34] sm:$0xf]
        %v867 = vld [vmem:[%s3 + $0x38] sm:$0xf]
        %v868 = vld [vmem:[%s3 + $0x3c] sm:$0xf]
        %v869 = vld [vmem:[%s4] sm:$0x1]
        %v871 = vperm.slane %v869, 0
        %v889 = vunpack.c.l.b16 %v853
        %v890 = vunpack.c.l.b16 %v854
        %v891 = vunpack.c.l.b16 %v855
        %v892 = vunpack.c.l.b16 %v856
        %v893 = vunpack.c.l.b16 %v857
        %v894 = vunpack.c.l.b16 %v858
        %v895 = vunpack.c.l.b16 %v859
        %v896 = vunpack.c.l.b16 %v860
        %v897 = vunpack.c.l.b16 %v861
        %v898 = vunpack.c.l.b16 %v862
        %v899 = vunpack.c.l.b16 %v863
        %v900 = vunpack.c.l.b16 %v864
        %v901 = vunpack.c.l.b16 %v865
        %v902 = vunpack.c.l.b16 %v866
        %v903 = vunpack.c.l.b16 %v867
        %v904 = vunpack.c.l.b16 %v868
        %v905 = vpack.c.b16 %v890, %v889
        %v906 = vpack.c.b16 %v892, %v891
        %v907 = vpack.c.b16 %v894, %v893
        %v908 = vpack.c.b16 %v896, %v895
        %v909 = vpack.c.b16 %v898, %v897
        %v910 = vpack.c.b16 %v900, %v899
        %v911 = vpack.c.b16 %v902, %v901
        %v912 = vpack.c.b16 %v904, %v903
        %921 = vmatpush.bf16.msra.mxu0 %v912
        %922 = vmatpush.bf16.msra.mxu0 %v911
        %923 = vmatpush.bf16.msra.mxu0 %v910
        %924 = vmatpush.bf16.msra.mxu0 %v909
        %925 = vmatpush.bf16.msra.mxu0 %v908
        %926 = vmatpush.bf16.msra.mxu0 %v907
        %927 = vmatpush.bf16.msra.mxu0 %v906
        %928 = vmatpush.bf16.msra.mxu0 %v905
        %929 = vmatmul.bf16.gmra.mxu0 %v821
        %v930 = vpop.f32.mrf.mxu0
        %v931 = vadd.f32 %v871, %v930
        %v932 = vpop.f32.mrf.mxu0
        %v933 = vadd.f32 %v871, %v932
        %934 = vmatmul.bf16.gmra.mxu0 %v822
        %v935 = vpop.f32.mrf.mxu0
        %v936 = vadd.f32 %v871, %v935
        %v937 = vpop.f32.mrf.mxu0
        %v938 = vadd.f32 %v871, %v937
        %939 = vmatmul.bf16.gmra.mxu0 %v823
        %v940 = vpop.f32.mrf.mxu0
        %v941 = vadd.f32 %v871, %v940
        %v942 = vpop.f32.mrf.mxu0
        %v943 = vadd.f32 %v871, %v942
        %944 = vmatmul.bf16.gmra.mxu0 %v824
        %v945 = vpop.f32.mrf.mxu0
        %v946 = vadd.f32 %v871, %v945
        %v947 = vpop.f32.mrf.mxu0
        %v948 = vadd.f32 %v871, %v947
        %949 = vmatmul.bf16.gmra.mxu0 %v825
        %v950 = vpop.f32.mrf.mxu0
        %v951 = vadd.f32 %v871, %v950
        %v952 = vpop.f32.mrf.mxu0
        %v953 = vadd.f32 %v871, %v952
        %954 = vmatmul.bf16.gmra.mxu0 %v826
        %v955 = vpop.f32.mrf.mxu0
        %v956 = vadd.f32 %v871, %v955
        %v957 = vpop.f32.mrf.mxu0
        %v958 = vadd.f32 %v871, %v957
        %959 = vmatmul.bf16.gmra.mxu0 %v827
        %v960 = vpop.f32.mrf.mxu0
        %v961 = vadd.f32 %v871, %v960
        %v962 = vpop.f32.mrf.mxu0
        %v963 = vadd.f32 %v871, %v962
        %964 = vmatmul.bf16.gmra.mxu0 %v828
        %v965 = vpop.f32.mrf.mxu0
        %v966 = vadd.f32 %v871, %v965
        %v967 = vpop.f32.mrf.mxu0
        %v968 = vadd.f32 %v871, %v967
        %969 = vmatmul.bf16.gmra.mxu0 %v829
        %v970 = vpop.f32.mrf.mxu0
        %v971 = vadd.f32 %v871, %v970
        %v972 = vpop.f32.mrf.mxu0
        %v973 = vadd.f32 %v871, %v972
        %974 = vmatmul.bf16.gmra.mxu0 %v830
        %v975 = vpop.f32.mrf.mxu0
        %v976 = vadd.f32 %v871, %v975
        %v977 = vpop.f32.mrf.mxu0
        %v978 = vadd.f32 %v871, %v977
        %979 = vmatmul.bf16.gmra.mxu0 %v831
        %v980 = vpop.f32.mrf.mxu0
        %v981 = vadd.f32 %v871, %v980
        %v982 = vpop.f32.mrf.mxu0
        %v983 = vadd.f32 %v871, %v982
        %984 = vmatmul.bf16.gmra.mxu0 %v832
        %v985 = vpop.f32.mrf.mxu0
        %v986 = vadd.f32 %v871, %v985
        %v987 = vpop.f32.mrf.mxu0
        %v988 = vadd.f32 %v871, %v987
        %989 = vmatmul.bf16.gmra.mxu0 %v833
        %v990 = vpop.f32.mrf.mxu0
        %v991 = vadd.f32 %v871, %v990
        %v992 = vpop.f32.mrf.mxu0
        %v993 = vadd.f32 %v871, %v992
        %994 = vmatmul.bf16.gmra.mxu0 %v834
        %v995 = vpop.f32.mrf.mxu0
        %v996 = vadd.f32 %v871, %v995
        %v997 = vpop.f32.mrf.mxu0
        %v998 = vadd.f32 %v871, %v997
        %999 = vmatmul.bf16.gmra.mxu0 %v835
        %v1000 = vpop.f32.mrf.mxu0
        %v1001 = vadd.f32 %v871, %v1000
        %v1002 = vpop.f32.mrf.mxu0
        %v1003 = vadd.f32 %v871, %v1002
        %1004 = vmatmul.bf16.gmra.mxu0 %v836
        %v1005 = vpop.f32.mrf.mxu0
        %v1006 = vadd.f32 %v871, %v1005
        %v1007 = vpop.f32.mrf.mxu0
        %v1008 = vadd.f32 %v871, %v1007
        %1009 = vmatmul.bf16.gmra.mxu0 %v837
        %v1010 = vpop.f32.mrf.mxu0
        %v1011 = vadd.f32 %v871, %v1010
        %v1012 = vpop.f32.mrf.mxu0
        %v1013 = vadd.f32 %v871, %v1012
        %1014 = vmatmul.bf16.gmra.mxu0 %v838
        %v1015 = vpop.f32.mrf.mxu0
        %v1016 = vadd.f32 %v871, %v1015
        %v1017 = vpop.f32.mrf.mxu0
        %v1018 = vadd.f32 %v871, %v1017
        %1019 = vmatmul.bf16.gmra.mxu0 %v839
        %v1020 = vpop.f32.mrf.mxu0
        %v1021 = vadd.f32 %v871, %v1020
        %v1022 = vpop.f32.mrf.mxu0
        %v1023 = vadd.f32 %v871, %v1022
        %1024 = vmatmul.bf16.gmra.mxu0 %v840
        %v1025 = vpop.f32.mrf.mxu0
        %v1026 = vadd.f32 %v871, %v1025
        %v1027 = vpop.f32.mrf.mxu0
        %v1028 = vadd.f32 %v871, %v1027
        %1029 = vmatmul.bf16.gmra.mxu0 %v841
        %v1030 = vpop.f32.mrf.mxu0
        %v1031 = vadd.f32 %v871, %v1030
        %v1032 = vpop.f32.mrf.mxu0
        %v1033 = vadd.f32 %v871, %v1032
        %1034 = vmatmul.bf16.gmra.mxu0 %v842
        %v1035 = vpop.f32.mrf.mxu0
        %v1036 = vadd.f32 %v871, %v1035
        %v1037 = vpop.f32.mrf.mxu0
        %v1038 = vadd.f32 %v871, %v1037
        %1039 = vmatmul.bf16.gmra.mxu0 %v843
        %v1040 = vpop.f32.mrf.mxu0
        %v1041 = vadd.f32 %v871, %v1040
        %v1042 = vpop.f32.mrf.mxu0
        %v1043 = vadd.f32 %v871, %v1042
        %1044 = vmatmul.bf16.gmra.mxu0 %v844
        %v1045 = vpop.f32.mrf.mxu0
        %v1046 = vadd.f32 %v871, %v1045
        %v1047 = vpop.f32.mrf.mxu0
        %v1048 = vadd.f32 %v871, %v1047
        %1049 = vmatmul.bf16.gmra.mxu0 %v845
        %v1050 = vpop.f32.mrf.mxu0
        %v1051 = vadd.f32 %v871, %v1050
        %v1052 = vpop.f32.mrf.mxu0
        %v1053 = vadd.f32 %v871, %v1052
        %1054 = vmatmul.bf16.gmra.mxu0 %v846
        %v1055 = vpop.f32.mrf.mxu0
        %v1056 = vadd.f32 %v871, %v1055
        %v1057 = vpop.f32.mrf.mxu0
        %v1058 = vadd.f32 %v871, %v1057
        %1059 = vmatmul.bf16.gmra.mxu0 %v847
        %v1060 = vpop.f32.mrf.mxu0
        %v1061 = vadd.f32 %v871, %v1060
        %v1062 = vpop.f32.mrf.mxu0
        %v1063 = vadd.f32 %v871, %v1062
        %1064 = vmatmul.bf16.gmra.mxu0 %v848
        %v1065 = vpop.f32.mrf.mxu0
        %v1066 = vadd.f32 %v871, %v1065
        %v1067 = vpop.f32.mrf.mxu0
        %v1068 = vadd.f32 %v871, %v1067
        %1069 = vmatmul.bf16.gmra.mxu0 %v849
        %v1070 = vpop.f32.mrf.mxu0
        %v1071 = vadd.f32 %v871, %v1070
        %v1072 = vpop.f32.mrf.mxu0
        %v1073 = vadd.f32 %v871, %v1072
        %1074 = vmatmul.bf16.gmra.mxu0 %v850
        %v1075 = vpop.f32.mrf.mxu0
        %v1076 = vadd.f32 %v871, %v1075
        %v1077 = vpop.f32.mrf.mxu0
        %v1078 = vadd.f32 %v871, %v1077
        %1079 = vmatmul.bf16.gmra.mxu0 %v851
        %v1080 = vpop.f32.mrf.mxu0
        %v1081 = vadd.f32 %v871, %v1080
        %v1082 = vpop.f32.mrf.mxu0
        %v1083 = vadd.f32 %v871, %v1082
        %1084 = vmatmul.bf16.gmra.mxu0 %v852
        %v1085 = vpop.f32.mrf.mxu0
        %v1086 = vadd.f32 %v871, %v1085
        %v1087 = vpop.f32.mrf.mxu0
        %v1088 = vadd.f32 %v871, %v1087
        %1089 = vdwg.mxu0
        %v1090 = vpack.c.bf16 %v931, %v931
        %v1091 = vpack.c.bf16 %v933, %v933
        %v1092 = vpack.c.bf16 %v936, %v936
        %v1093 = vpack.c.bf16 %v938, %v938
        %v1094 = vpack.c.bf16 %v941, %v941
        %v1095 = vpack.c.bf16 %v943, %v943
        %v1096 = vpack.c.bf16 %v946, %v946
        %v1097 = vpack.c.bf16 %v948, %v948
        %v1098 = vpack.c.bf16 %v951, %v951
        %v1099 = vpack.c.bf16 %v953, %v953
        %v1100 = vpack.c.bf16 %v956, %v956
        %v1101 = vpack.c.bf16 %v958, %v958
        %v1102 = vpack.c.bf16 %v961, %v961
        %v1103 = vpack.c.bf16 %v963, %v963
        %v1104 = vpack.c.bf16 %v966, %v966
        %v1105 = vpack.c.bf16 %v968, %v968
        %v1106 = vpack.c.bf16 %v971, %v971
        %v1107 = vpack.c.bf16 %v973, %v973
        %v1108 = vpack.c.bf16 %v976, %v976
        %v1109 = vpack.c.bf16 %v978, %v978
        %v1110 = vpack.c.bf16 %v981, %v981
        %v1111 = vpack.c.bf16 %v983, %v983
        %v1112 = vpack.c.bf16 %v986, %v986
        %v1113 = vpack.c.bf16 %v988, %v988
        %v1114 = vpack.c.bf16 %v991, %v991
        %v1115 = vpack.c.bf16 %v993, %v993
        %v1116 = vpack.c.bf16 %v996, %v996
        %v1117 = vpack.c.bf16 %v998, %v998
        %v1118 = vpack.c.bf16 %v1001, %v1001
        %v1119 = vpack.c.bf16 %v1003, %v1003
        %v1120 = vpack.c.bf16 %v1006, %v1006
        %v1121 = vpack.c.bf16 %v1008, %v1008
        %v1122 = vpack.c.bf16 %v1011, %v1011
        %v1123 = vpack.c.bf16 %v1013, %v1013
        %v1124 = vpack.c.bf16 %v1016, %v1016
        %v1125 = vpack.c.bf16 %v1018, %v1018
        %v1126 = vpack.c.bf16 %v1021, %v1021
        %v1127 = vpack.c.bf16 %v1023, %v1023
        %v1128 = vpack.c.bf16 %v1026, %v1026
        %v1129 = vpack.c.bf16 %v1028, %v1028
        %v1130 = vpack.c.bf16 %v1031, %v1031
        %v1131 = vpack.c.bf16 %v1033, %v1033
        %v1132 = vpack.c.bf16 %v1036, %v1036
        %v1133 = vpack.c.bf16 %v1038, %v1038
        %v1134 = vpack.c.bf16 %v1041, %v1041
        %v1135 = vpack.c.bf16 %v1043, %v1043
        %v1136 = vpack.c.bf16 %v1046, %v1046
        %v1137 = vpack.c.bf16 %v1048, %v1048
        %v1138 = vpack.c.bf16 %v1051, %v1051
        %v1139 = vpack.c.bf16 %v1053, %v1053
        %v1140 = vpack.c.bf16 %v1056, %v1056
        %v1141 = vpack.c.bf16 %v1058, %v1058
        %v1142 = vpack.c.bf16 %v1061, %v1061
        %v1143 = vpack.c.bf16 %v1063, %v1063
        %v1144 = vpack.c.bf16 %v1066, %v1066
        %v1145 = vpack.c.bf16 %v1068, %v1068
        %v1146 = vpack.c.bf16 %v1071, %v1071
        %v1147 = vpack.c.bf16 %v1073, %v1073
        %v1148 = vpack.c.bf16 %v1076, %v1076
        %v1149 = vpack.c.bf16 %v1078, %v1078
        %v1150 = vpack.c.bf16 %v1081, %v1081
        %v1151 = vpack.c.bf16 %v1083, %v1083
        %v1152 = vpack.c.bf16 %v1086, %v1086
        %v1153 = vpack.c.bf16 %v1088, %v1088
        %1154 = vst [vmem:[%s226] sm:$0xf] %v1090
        %1155 = vst [vmem:[%s226 + $0x4] sm:$0xf] %v1091
        %1156 = vst [vmem:[%s226 + $0x8] sm:$0xf] %v1092
        %1157 = vst [vmem:[%s226 + $0xc] sm:$0xf] %v1093
        %1158 = vst [vmem:[%s226 + $0x10] sm:$0xf] %v1094
        %1159 = vst [vmem:[%s226 + $0x14] sm:$0xf] %v1095
        %1160 = vst [vmem:[%s226 + $0x18] sm:$0xf] %v1096
        %1161 = vst [vmem:[%s226 + $0x1c] sm:$0xf] %v1097
        %1162 = vst [vmem:[%s226 + $0x20] sm:$0xf] %v1098
        %1163 = vst [vmem:[%s226 + $0x24] sm:$0xf] %v1099
        %1164 = vst [vmem:[%s226 + $0x28] sm:$0xf] %v1100
        %1165 = vst [vmem:[%s226 + $0x2c] sm:$0xf] %v1101
        %1166 = vst [vmem:[%s226 + $0x30] sm:$0xf] %v1102
        %1167 = vst [vmem:[%s226 + $0x34] sm:$0xf] %v1103
        %1168 = vst [vmem:[%s226 + $0x38] sm:$0xf] %v1104
        %1169 = vst [vmem:[%s226 + $0x3c] sm:$0xf] %v1105
        %1170 = vst [vmem:[%s226 + $0x40] sm:$0xf] %v1106
        %1171 = vst [vmem:[%s226 + $0x44] sm:$0xf] %v1107
        %1172 = vst [vmem:[%s226 + $0x48] sm:$0xf] %v1108
        %1173 = vst [vmem:[%s226 + $0x4c] sm:$0xf] %v1109
        %1174 = vst [vmem:[%s226 + $0x50] sm:$0xf] %v1110
        %1175 = vst [vmem:[%s226 + $0x54] sm:$0xf] %v1111
        %1176 = vst [vmem:[%s226 + $0x58] sm:$0xf] %v1112
        %1177 = vst [vmem:[%s226 + $0x5c] sm:$0xf] %v1113
        %1178 = vst [vmem:[%s226 + $0x60] sm:$0xf] %v1114
        %1179 = vst [vmem:[%s226 + $0x64] sm:$0xf] %v1115
        %1180 = vst [vmem:[%s226 + $0x68] sm:$0xf] %v1116
        %1181 = vst [vmem:[%s226 + $0x6c] sm:$0xf] %v1117
        %1182 = vst [vmem:[%s226 + $0x70] sm:$0xf] %v1118
        %1183 = vst [vmem:[%s226 + $0x74] sm:$0xf] %v1119
        %1184 = vst [vmem:[%s226 + $0x78] sm:$0xf] %v1120
        %1185 = vst [vmem:[%s226 + $0x7c] sm:$0xf] %v1121
        %1186 = vst [vmem:[%s226 + $0x80] sm:$0xf] %v1122
        %1187 = vst [vmem:[%s226 + $0x84] sm:$0xf] %v1123
        %1188 = vst [vmem:[%s226 + $0x88] sm:$0xf] %v1124
        %1189 = vst [vmem:[%s226 + $0x8c] sm:$0xf] %v1125
        %1190 = vst [vmem:[%s226 + $0x90] sm:$0xf] %v1126
        %1191 = vst [vmem:[%s226 + $0x94] sm:$0xf] %v1127
        %1192 = vst [vmem:[%s226 + $0x98] sm:$0xf] %v1128
        %1193 = vst [vmem:[%s226 + $0x9c] sm:$0xf] %v1129
        %1194 = vst [vmem:[%s226 + $0xa0] sm:$0xf] %v1130
        %1195 = vst [vmem:[%s226 + $0xa4] sm:$0xf] %v1131
        %1196 = vst [vmem:[%s226 + $0xa8] sm:$0xf] %v1132
        %1197 = vst [vmem:[%s226 + $0xac] sm:$0xf] %v1133
        %1198 = vst [vmem:[%s226 + $0xb0] sm:$0xf] %v1134
        %1199 = vst [vmem:[%s226 + $0xb4] sm:$0xf] %v1135
        %1200 = vst [vmem:[%s226 + $0xb8] sm:$0xf] %v1136
        %1201 = vst [vmem:[%s226 + $0xbc] sm:$0xf] %v1137
        %1202 = vst [vmem:[%s226 + $0xc0] sm:$0xf] %v1138
        %1203 = vst [vmem:[%s226 + $0xc4] sm:$0xf] %v1139
        %1204 = vst [vmem:[%s226 + $0xc8] sm:$0xf] %v1140
        %1205 = vst [vmem:[%s226 + $0xcc] sm:$0xf] %v1141
        %1206 = vst [vmem:[%s226 + $0xd0] sm:$0xf] %v1142
        %1207 = vst [vmem:[%s226 + $0xd4] sm:$0xf] %v1143
        %1208 = vst [vmem:[%s226 + $0xd8] sm:$0xf] %v1144
        %1209 = vst [vmem:[%s226 + $0xdc] sm:$0xf] %v1145
        %1210 = vst [vmem:[%s226 + $0xe0] sm:$0xf] %v1146
        %1211 = vst [vmem:[%s226 + $0xe4] sm:$0xf] %v1147
        %1212 = vst [vmem:[%s226 + $0xe8] sm:$0xf] %v1148
        %1213 = vst [vmem:[%s226 + $0xec] sm:$0xf] %v1149
        %1214 = vst [vmem:[%s226 + $0xf0] sm:$0xf] %v1150
        %1215 = vst [vmem:[%s226 + $0xf4] sm:$0xf] %v1151
        %1216 = vst [vmem:[%s226 + $0xf8] sm:$0xf] %v1152
        %1217 = vst [vmem:[%s226 + $0xfc] sm:$0xf] %v1153
        %s1218 = sand.u32 %s134, 1
        %s1219 = sand.u32 %s134, 1
        %s1220 = smul.addr %s1219, 256
        %s1221 = scalar_lea.vmem [#allocation2], %s1220
        // Predicated region
        $region41: #{f.1} parent=39 // pred_check
          %p1222 = pneg %p144
        $region42: #{f.1} parent=39 // pred_check_branch
          %1224 = sbr.rel (%p1222) target = $region44
        $region43: #{f.1} parent=39 // pred_region
          %s1225 = smul.u32 64, %s16
          %s1226 = ssub.s32 125, %s1225
          %p1227 = scmp.lt.s32.totalorder %s1226, 64
          %s1228 = scalar_select %p1227, %s1226, 64
          %s1229 = smul.u32 4, %s1228
          %p1230 = scmp.ne.s32.totalorder 0, %s1229
          %s1231 = smul.addr %s1225, 4
          %s1232 = scalar_lea.vmem %s5, %s1231
          // Predicated region
          $region45: #{f.1} parent=43 // pred_check
            %p1233 = pneg %p1230
          $region46: #{f.1} parent=43 // pred_check_branch
            %1235 = sbr.rel (%p1233) target = $region48
          $region47: #{f.1} parent=43 // pred_region
            // Predicated region
            $region49: #{f.1} parent=47 // pred_check
              _
            $region50: #{f.1} parent=47 // pred_check_branch
              %1237 = sbr.rel target = $region52
            $region51: #{f.1} parent=47 // pred_region
              // Predicated region
              $region71: #{f.1} parent=51 // pred_check
                _
              $region72: #{f.1} parent=51 // pred_check_branch
                %1349 = sbr.rel (0) target = $region74
              $region73: #{f.1} parent=51 // pred_region
                %s1351 = ssub.s32 16, 1
                %s1352 = sshrl.u32 %s1228, 5
                // While loop
                $region75: #{f.1} parent=73 // loop_pre_header
                  _
                $region76: #{f.1} parent=73 // loop_header
                  %s1354 = sphi 0, %s1356
                  %p1355 = scmp.ge.s32.totalorder %s1354, %s1352
                  %s1359 = sphi 0, %s1428
                  %s1360 = sphi %s1221, %s1431
                  %s1361 = sphi %s1232, %s1432
                $region77: #{f.1} parent=73 // loop_header_branch
                  %1358 = sbr.rel (%p1355) target = $region81
                $region78: #{f.1} parent=73 // loop_body
                  %v1362 = vld [vmem:[%s1360] sm:%s1351]
                  %1363 = vst [vmem:[%s1361] sm:%s1351] %v1362
                  %v1364 = vld [vmem:[%s1360 + $0x4] sm:%s1351]
                  %1365 = vst [vmem:[%s1361 + $0x4] sm:%s1351] %v1364
                  %v1366 = vld [vmem:[%s1360 + $0x8] sm:%s1351]
                  %1367 = vst [vmem:[%s1361 + $0x8] sm:%s1351] %v1366
                  %v1368 = vld [vmem:[%s1360 + $0xc] sm:%s1351]
                  %1369 = vst [vmem:[%s1361 + $0xc] sm:%s1351] %v1368
                  %v1370 = vld [vmem:[%s1360 + $0x10] sm:%s1351]
                  %1371 = vst [vmem:[%s1361 + $0x10] sm:%s1351] %v1370
                  %v1372 = vld [vmem:[%s1360 + $0x14] sm:%s1351]
                  %1373 = vst [vmem:[%s1361 + $0x14] sm:%s1351] %v1372
                  %v1374 = vld [vmem:[%s1360 + $0x18] sm:%s1351]
                  %1375 = vst [vmem:[%s1361 + $0x18] sm:%s1351] %v1374
                  %v1376 = vld [vmem:[%s1360 + $0x1c] sm:%s1351]
                  %1377 = vst [vmem:[%s1361 + $0x1c] sm:%s1351] %v1376
                  %v1378 = vld [vmem:[%s1360 + $0x20] sm:%s1351]
                  %1379 = vst [vmem:[%s1361 + $0x20] sm:%s1351] %v1378
                  %v1380 = vld [vmem:[%s1360 + $0x24] sm:%s1351]
                  %1381 = vst [vmem:[%s1361 + $0x24] sm:%s1351] %v1380
                  %v1382 = vld [vmem:[%s1360 + $0x28] sm:%s1351]
                  %1383 = vst [vmem:[%s1361 + $0x28] sm:%s1351] %v1382
                  %v1384 = vld [vmem:[%s1360 + $0x2c] sm:%s1351]
                  %1385 = vst [vmem:[%s1361 + $0x2c] sm:%s1351] %v1384
                  %v1386 = vld [vmem:[%s1360 + $0x30] sm:%s1351]
                  %1387 = vst [vmem:[%s1361 + $0x30] sm:%s1351] %v1386
                  %v1388 = vld [vmem:[%s1360 + $0x34] sm:%s1351]
                  %1389 = vst [vmem:[%s1361 + $0x34] sm:%s1351] %v1388
                  %v1390 = vld [vmem:[%s1360 + $0x38] sm:%s1351]
                  %1391 = vst [vmem:[%s1361 + $0x38] sm:%s1351] %v1390
                  %v1392 = vld [vmem:[%s1360 + $0x3c] sm:%s1351]
                  %1393 = vst [vmem:[%s1361 + $0x3c] sm:%s1351] %v1392
                  %v1394 = vld [vmem:[%s1360 + $0x40] sm:%s1351]
                  %1395 = vst [vmem:[%s1361 + $0x40] sm:%s1351] %v1394
                  %v1396 = vld [vmem:[%s1360 + $0x44] sm:%s1351]
                  %1397 = vst [vmem:[%s1361 + $0x44] sm:%s1351] %v1396
                  %v1398 = vld [vmem:[%s1360 + $0x48] sm:%s1351]
                  %1399 = vst [vmem:[%s1361 + $0x48] sm:%s1351] %v1398
                  %v1400 = vld [vmem:[%s1360 + $0x4c] sm:%s1351]
                  %1401 = vst [vmem:[%s1361 + $0x4c] sm:%s1351] %v1400
                  %v1402 = vld [vmem:[%s1360 + $0x50] sm:%s1351]
                  %1403 = vst [vmem:[%s1361 + $0x50] sm:%s1351] %v1402
                  %v1404 = vld [vmem:[%s1360 + $0x54] sm:%s1351]
                  %1405 = vst [vmem:[%s1361 + $0x54] sm:%s1351] %v1404
                  %v1406 = vld [vmem:[%s1360 + $0x58] sm:%s1351]
                  %1407 = vst [vmem:[%s1361 + $0x58] sm:%s1351] %v1406
                  %v1408 = vld [vmem:[%s1360 + $0x5c] sm:%s1351]
                  %1409 = vst [vmem:[%s1361 + $0x5c] sm:%s1351] %v1408
                  %v1410 = vld [vmem:[%s1360 + $0x60] sm:%s1351]
                  %1411 = vst [vmem:[%s1361 + $0x60] sm:%s1351] %v1410
                  %v1412 = vld [vmem:[%s1360 + $0x64] sm:%s1351]
                  %1413 = vst [vmem:[%s1361 + $0x64] sm:%s1351] %v1412
                  %v1414 = vld [vmem:[%s1360 + $0x68] sm:%s1351]
                  %1415 = vst [vmem:[%s1361 + $0x68] sm:%s1351] %v1414
                  %v1416 = vld [vmem:[%s1360 + $0x6c] sm:%s1351]
                  %1417 = vst [vmem:[%s1361 + $0x6c] sm:%s1351] %v1416
                  %v1418 = vld [vmem:[%s1360 + $0x70] sm:%s1351]
                  %1419 = vst [vmem:[%s1361 + $0x70] sm:%s1351] %v1418
                  %v1420 = vld [vmem:[%s1360 + $0x74] sm:%s1351]
                  %1421 = vst [vmem:[%s1361 + $0x74] sm:%s1351] %v1420
                  %v1422 = vld [vmem:[%s1360 + $0x78] sm:%s1351]
                  %1423 = vst [vmem:[%s1361 + $0x78] sm:%s1351] %v1422
                  %v1424 = vld [vmem:[%s1360 + $0x7c] sm:%s1351]
                  %1425 = vst [vmem:[%s1361 + $0x7c] sm:%s1351] %v1424
                  %s1426 = sadd.s32 1, %s1359
                  %p1427 = scmp.ge.s32.totalorder %s1426, %s1352
                  %s1428 = scalar_select %p1427, 0, %s1426
                  %s1429 = smul.u32 %s1428, 128
                  %s1430 = smul.u32 %s1428, 128
                  %s1431 = scalar_lea.vmem %s1221, %s1429 [#allocation2]
                  %s1432 = scalar_lea.vmem %s1232, %s1430
                $region79: #{f.1} parent=73 // loop_footer
                  %s1356 = sadd.s32 %s1354, 1
                $region80: #{f.1} parent=73 // loop_footer_branch
                  %1353 = sbr.rel target = $region76
                $region81: #{f.1} parent=73 // loop_exit
                  _
                %s1433 = sshrl.u32 %s1228, 5
                %s1434 = sand.u32 %s1228, 31
                %s1435 = smul.u32 %s1433, 32
                %s1436 = smul.u32 4, %s1435
                %s1437 = scalar_lea.vmem %s1221, %s1436 [#allocation2]
                %s1438 = smul.u32 4, %s1435
                %s1439 = scalar_lea.vmem %s1232, %s1438
                // While loop
                $region82: #{f.1} parent=73 // loop_pre_header
                  _
                $region83: #{f.1} parent=73 // loop_header
                  %s1441 = sphi 0, %s1443
                  %p1442 = scmp.ge.s32.totalorder %s1441, %s1434
                  %s1446 = sphi 0, %s1453
                  %s1447 = sphi %s1437, %s1456
                  %s1448 = sphi %s1439, %s1457
                $region84: #{f.1} parent=73 // loop_header_branch
                  %1445 = sbr.rel (%p1442) target = $region88
                $region85: #{f.1} parent=73 // loop_body
                  %v1449 = vld [vmem:[%s1447] sm:%s1351]
                  %1450 = vst [vmem:[%s1448] sm:%s1351] %v1449
                  %s1451 = sadd.s32 1, %s1446
                  %p1452 = scmp.ge.s32.totalorder %s1451, %s1434
                  %s1453 = scalar_select %p1452, 0, %s1451
                  %s1454 = smul.u32 %s1453, 4
                  %s1455 = smul.u32 %s1453, 4
                  %s1456 = scalar_lea.vmem %s1437, %s1454 [#allocation2]
                  %s1457 = scalar_lea.vmem %s1439, %s1455
                $region86: #{f.1} parent=73 // loop_footer
                  %s1443 = sadd.s32 %s1441, 1
                $region87: #{f.1} parent=73 // loop_footer_branch
                  %1440 = sbr.rel target = $region83
                $region88: #{f.1} parent=73 // loop_exit
                  _
              $region74: #{f.1} parent=51 // pred_fallthru
                _
            $region52: #{f.1} parent=47 // pred_fallthru
              _
            // Predicated region
            $region53: #{f.1} parent=47 // pred_check
              _
            $region54: #{f.1} parent=47 // pred_check_branch
              %1239 = sbr.rel (0) target = $region56
            $region55: #{f.1} parent=47 // pred_region
              %s1241 = ssub.s32 16, 1
              %s1242 = sshrl.u32 %s1228, 5
              // While loop
              $region57: #{f.1} parent=55 // loop_pre_header
                _
              $region58: #{f.1} parent=55 // loop_header
                %s1244 = sphi 0, %s1246
                %p1245 = scmp.ge.s32.totalorder %s1244, %s1242
                %s1249 = sphi 0, %s1318
                %s1250 = sphi %s1221, %s1321
                %s1251 = sphi %s1232, %s1322
              $region59: #{f.1} parent=55 // loop_header_branch
                %1248 = sbr.rel (%p1245) target = $region63
              $region60: #{f.1} parent=55 // loop_body
                %v1252 = vld [vmem:[%s1250] sm:%s1241]
                %1253 = vst [vmem:[%s1251] sm:%s1241] %v1252
                %v1254 = vld [vmem:[%s1250 + $0x4] sm:%s1241]
                %1255 = vst [vmem:[%s1251 + $0x4] sm:%s1241] %v1254
                %v1256 = vld [vmem:[%s1250 + $0x8] sm:%s1241]
                %1257 = vst [vmem:[%s1251 + $0x8] sm:%s1241] %v1256
                %v1258 = vld [vmem:[%s1250 + $0xc] sm:%s1241]
                %1259 = vst [vmem:[%s1251 + $0xc] sm:%s1241] %v1258
                %v1260 = vld [vmem:[%s1250 + $0x10] sm:%s1241]
                %1261 = vst [vmem:[%s1251 + $0x10] sm:%s1241] %v1260
                %v1262 = vld [vmem:[%s1250 + $0x14] sm:%s1241]
                %1263 = vst [vmem:[%s1251 + $0x14] sm:%s1241] %v1262
                %v1264 = vld [vmem:[%s1250 + $0x18] sm:%s1241]
                %1265 = vst [vmem:[%s1251 + $0x18] sm:%s1241] %v1264
                %v1266 = vld [vmem:[%s1250 + $0x1c] sm:%s1241]
                %1267 = vst [vmem:[%s1251 + $0x1c] sm:%s1241] %v1266
                %v1268 = vld [vmem:[%s1250 + $0x20] sm:%s1241]
                %1269 = vst [vmem:[%s1251 + $0x20] sm:%s1241] %v1268
                %v1270 = vld [vmem:[%s1250 + $0x24] sm:%s1241]
                %1271 = vst [vmem:[%s1251 + $0x24] sm:%s1241] %v1270
                %v1272 = vld [vmem:[%s1250 + $0x28] sm:%s1241]
                %1273 = vst [vmem:[%s1251 + $0x28] sm:%s1241] %v1272
                %v1274 = vld [vmem:[%s1250 + $0x2c] sm:%s1241]
                %1275 = vst [vmem:[%s1251 + $0x2c] sm:%s1241] %v1274
                %v1276 = vld [vmem:[%s1250 + $0x30] sm:%s1241]
                %1277 = vst [vmem:[%s1251 + $0x30] sm:%s1241] %v1276
                %v1278 = vld [vmem:[%s1250 + $0x34] sm:%s1241]
                %1279 = vst [vmem:[%s1251 + $0x34] sm:%s1241] %v1278
                %v1280 = vld [vmem:[%s1250 + $0x38] sm:%s1241]
                %1281 = vst [vmem:[%s1251 + $0x38] sm:%s1241] %v1280
                %v1282 = vld [vmem:[%s1250 + $0x3c] sm:%s1241]
                %1283 = vst [vmem:[%s1251 + $0x3c] sm:%s1241] %v1282
                %v1284 = vld [vmem:[%s1250 + $0x40] sm:%s1241]
                %1285 = vst [vmem:[%s1251 + $0x40] sm:%s1241] %v1284
                %v1286 = vld [vmem:[%s1250 + $0x44] sm:%s1241]
                %1287 = vst [vmem:[%s1251 + $0x44] sm:%s1241] %v1286
                %v1288 = vld [vmem:[%s1250 + $0x48] sm:%s1241]
                %1289 = vst [vmem:[%s1251 + $0x48] sm:%s1241] %v1288
                %v1290 = vld [vmem:[%s1250 + $0x4c] sm:%s1241]
                %1291 = vst [vmem:[%s1251 + $0x4c] sm:%s1241] %v1290
                %v1292 = vld [vmem:[%s1250 + $0x50] sm:%s1241]
                %1293 = vst [vmem:[%s1251 + $0x50] sm:%s1241] %v1292
                %v1294 = vld [vmem:[%s1250 + $0x54] sm:%s1241]
                %1295 = vst [vmem:[%s1251 + $0x54] sm:%s1241] %v1294
                %v1296 = vld [vmem:[%s1250 + $0x58] sm:%s1241]
                %1297 = vst [vmem:[%s1251 + $0x58] sm:%s1241] %v1296
                %v1298 = vld [vmem:[%s1250 + $0x5c] sm:%s1241]
                %1299 = vst [vmem:[%s1251 + $0x5c] sm:%s1241] %v1298
                %v1300 = vld [vmem:[%s1250 + $0x60] sm:%s1241]
                %1301 = vst [vmem:[%s1251 + $0x60] sm:%s1241] %v1300
                %v1302 = vld [vmem:[%s1250 + $0x64] sm:%s1241]
                %1303 = vst [vmem:[%s1251 + $0x64] sm:%s1241] %v1302
                %v1304 = vld [vmem:[%s1250 + $0x68] sm:%s1241]
                %1305 = vst [vmem:[%s1251 + $0x68] sm:%s1241] %v1304
                %v1306 = vld [vmem:[%s1250 + $0x6c] sm:%s1241]
                %1307 = vst [vmem:[%s1251 + $0x6c] sm:%s1241] %v1306
                %v1308 = vld [vmem:[%s1250 + $0x70] sm:%s1241]
                %1309 = vst [vmem:[%s1251 + $0x70] sm:%s1241] %v1308
                %v1310 = vld [vmem:[%s1250 + $0x74] sm:%s1241]
                %1311 = vst [vmem:[%s1251 + $0x74] sm:%s1241] %v1310
                %v1312 = vld [vmem:[%s1250 + $0x78] sm:%s1241]
                %1313 = vst [vmem:[%s1251 + $0x78] sm:%s1241] %v1312
                %v1314 = vld [vmem:[%s1250 + $0x7c] sm:%s1241]
                %1315 = vst [vmem:[%s1251 + $0x7c] sm:%s1241] %v1314
                %s1316 = sadd.s32 1, %s1249
                %p1317 = scmp.ge.s32.totalorder %s1316, %s1242
                %s1318 = scalar_select %p1317, 0, %s1316
                %s1319 = smul.u32 %s1318, 128
                %s1320 = smul.u32 %s1318, 128
                %s1321 = scalar_lea.vmem %s1221, %s1319 [#allocation2]
                %s1322 = scalar_lea.vmem %s1232, %s1320
              $region61: #{f.1} parent=55 // loop_footer
                %s1246 = sadd.s32 %s1244, 1
              $region62: #{f.1} parent=55 // loop_footer_branch
                %1243 = sbr.rel target = $region58
              $region63: #{f.1} parent=55 // loop_exit
                _
              %s1323 = sshrl.u32 %s1228, 5
              %s1324 = sand.u32 %s1228, 31
              %s1325 = smul.u32 %s1323, 32
              %s1326 = smul.u32 4, %s1325
              %s1327 = scalar_lea.vmem %s1221, %s1326 [#allocation2]
              %s1328 = smul.u32 4, %s1325
              %s1329 = scalar_lea.vmem %s1232, %s1328
              // While loop
              $region64: #{f.1} parent=55 // loop_pre_header
                _
              $region65: #{f.1} parent=55 // loop_header
                %s1331 = sphi 0, %s1333
                %p1332 = scmp.ge.s32.totalorder %s1331, %s1324
                %s1336 = sphi 0, %s1343
                %s1337 = sphi %s1327, %s1346
                %s1338 = sphi %s1329, %s1347
              $region66: #{f.1} parent=55 // loop_header_branch
                %1335 = sbr.rel (%p1332) target = $region70
              $region67: #{f.1} parent=55 // loop_body
                %v1339 = vld [vmem:[%s1337] sm:%s1241]
                %1340 = vst [vmem:[%s1338] sm:%s1241] %v1339
                %s1341 = sadd.s32 1, %s1336
                %p1342 = scmp.ge.s32.totalorder %s1341, %s1324
                %s1343 = scalar_select %p1342, 0, %s1341
                %s1344 = smul.u32 %s1343, 4
                %s1345 = smul.u32 %s1343, 4
                %s1346 = scalar_lea.vmem %s1327, %s1344 [#allocation2]
                %s1347 = scalar_lea.vmem %s1329, %s1345
              $region68: #{f.1} parent=55 // loop_footer
                %s1333 = sadd.s32 %s1331, 1
              $region69: #{f.1} parent=55 // loop_footer_branch
                %1330 = sbr.rel target = $region65
              $region70: #{f.1} parent=55 // loop_exit
                _
            $region56: #{f.1} parent=47 // pred_fallthru
              _
          $region48: #{f.1} parent=43 // pred_fallthru
            _
          %1458 = vnop
        $region44: #{f.1} parent=39 // pred_fallthru
          _
      $region40: #{f.1} parent=5 // pred_fallthru
        _
      %p1459 = scmp.le.s32.totalorder 2, %s11
      // Predicated region
      $region89: #{f.1} parent=5 // pred_check
        %p1460 = pneg %p1459
      $region90: #{f.1} parent=5 // pred_check_branch
        %1462 = sbr.rel (%p1460) target = $region92
      $region91: #{f.1} parent=5 // pred_region
        %s1463 = ssub.s32 %s11, 2
        // Predicated region
        $region93: #{f.1} parent=91 // pred_check
          %p1464 = pneg %p150
        $region94: #{f.1} parent=91 // pred_check_branch
          %1466 = sbr.rel (%p1464) target = $region96
        $region95: #{f.1} parent=91 // pred_region
          %s1467 = sand.u32 %s135, 1
          %s1468 = sand.u32 %s135, 1
          %s1469 = smul.addr %s1468, 256
          %s1470 = scalar_lea.vmem [#allocation2], %s1469
        $region96: #{f.1} parent=91 // pred_fallthru
          _
      $region92: #{f.1} parent=5 // pred_fallthru
        _
    $region6: #{f.1} parent=1 // loop_footer
      %s15 = sadd.s32 1, %s11
    $region7: #{f.1} parent=1 // loop_footer_branch
      %10 = sbr.rel target = $region3
    $region8: #{f.1} parent=1 // loop_exit
      _

</llo_original>
